<compile_context>
chip_gen: v7x
topology: tpu7x:2x2x1
jax: 0.10.0
libtpu: 0.0.40
codegen_flags: <defaults>
</compile_context>

<pallas_src>
import jax
import jax.numpy as jnp
from jax.experimental import pallas as pl
from jax.experimental.pallas import tpu as pltpu

# ---- model hyper-parameters (small, consistent with the module's args dict) ----
B        = 8            # batch
MAXLEN   = 8            # sequence length of inputs1
VOCAB    = 32           # args['Feature']['max_features']
EMB      = 32           # args['Feature']['embedding_dims']
C2       = 32           # width of inputs2 (data columns past MAXLEN)
C        = EMB + C2     # args['cheb_conv']['out_channels'] (BatchNorm1d width)
NCLASSES = 32           # args['nb_classes']
BN_EPS   = 1e-5

# ---- packed-parameter slab layout: [PARAM_ROWS, 128] f32, rows 8-aligned ----
LANES     = 128
R_EMB     = 0                       # rows [0,   32)  cols [0, EMB)      : embedding table
R_GAMMA   = R_EMB + VOCAB           # row  32         cols [0, C)        : BN gamma
R_BETA    = R_GAMMA + 8             # row  40         cols [0, C)        : BN beta
R_WH      = R_BETA + 8              # rows [48, 112)  cols [0, NCLASSES) : hie weight [C, NCLASSES]
R_BH      = R_WH + C                # row  112        cols [0, NCLASSES) : hie bias
R_WO      = R_BH + 8                # rows [120, 152) cols [0, 128)      : out weight (zero-padded cols)
R_BO      = R_WO + NCLASSES         # row  152        cols [0, 128)      : out bias (zero-padded cols)
PARAM_ROWS = 160                    # pad to multiple of 8


def deepgo_kernel(data_ref, params_ref, out_ref):
    data = data_ref[...]                                   # [B, MAXLEN + C2]
    # split + round-before-cast in-kernel (no host-side slice arrays)
    tok  = jnp.round(data[:, :MAXLEN]).astype(jnp.int32)   # [B, MAXLEN]
    inp2 = data[:, MAXLEN:]                                # [B, C2]

    # ---------- FeatureModel: token histogram + single matmul ----------
    # hist[b, v] = #{m : tok[b, m] == v};  mean-pooled embedding = (hist/MAXLEN) @ emb
    vocab_ids = jax.lax.broadcasted_iota(jnp.int32, (B, VOCAB), 1)
    hist = jnp.zeros((B, VOCAB), jnp.float32)
    for m in range(MAXLEN):                                # unrolled VPU compare/adds
        hist = hist + (tok[:, m:m + 1] == vocab_ids).astype(jnp.float32)

    emb = params_ref[R_EMB:R_EMB + VOCAB, :EMB]            # [VOCAB, EMB]
    feature = jnp.dot(hist * (1.0 / MAXLEN), emb,
                      preferred_element_type=jnp.float32)  # [B, EMB]

    # ---------- BatchNorm1d (training mode, biased stats), applied per half ----
    gamma = params_ref[R_GAMMA:R_GAMMA + 1, :C]            # [1, C]
    beta  = params_ref[R_BETA:R_BETA + 1, :C]              # [1, C]

    def bn(x, g, b):
        mean = jnp.mean(x, axis=0, keepdims=True)
        var  = jnp.mean((x - mean) ** 2, axis=0, keepdims=True)
        return (x - mean) * jax.lax.rsqrt(var + BN_EPS) * g + b

    normed_f = bn(feature, gamma[:, :EMB], beta[:, :EMB])  # [B, EMB]
    normed_i = bn(inp2,    gamma[:, EMB:], beta[:, EMB:])  # [B, C2]

    # ---------- Hierarchical classifier: split GEMM (no lane concat) + sigmoid --
    w_hf = params_ref[R_WH:R_WH + EMB, :NCLASSES]          # [EMB, NCLASSES]
    w_hi = params_ref[R_WH + EMB:R_WH + C, :NCLASSES]      # [C2,  NCLASSES]
    b_h  = params_ref[R_BH:R_BH + 1, :NCLASSES]            # [1,   NCLASSES]
    h = (jnp.dot(normed_f, w_hf, preferred_element_type=jnp.float32)
         + jnp.dot(normed_i, w_hi, preferred_element_type=jnp.float32)
         + b_h)
    x2 = jax.nn.sigmoid(h)                                 # [B, NCLASSES]

    # ---------- outlayer: Linear(nb_classes, nb_classes), lane-dense store -----
    w_o = params_ref[R_WO:R_WO + NCLASSES, :]              # [NCLASSES, 128] (zero-padded cols)
    b_o = params_ref[R_BO:R_BO + 1, :]                     # [1, 128]        (zero-padded cols)
    out_ref[...] = jnp.dot(x2, w_o,
                           preferred_element_type=jnp.float32) + b_o   # [B, 128]


@jax.jit
def deepgo_forward(data, param_slab):
    # single call, no grid, whole arrays resident in VMEM (no pipeline scaffolding)
    out_padded = pl.pallas_call(
        deepgo_kernel,
        out_shape=jax.ShapeDtypeStruct((B, LANES), jnp.float32),
        in_specs=[pl.BlockSpec(memory_space=pltpu.MemorySpace.VMEM),
                  pl.BlockSpec(memory_space=pltpu.MemorySpace.VMEM)],
        out_specs=pl.BlockSpec(memory_space=pltpu.MemorySpace.VMEM),
    )(data.astype(jnp.float32), param_slab)
    return out_padded[:, :NCLASSES]


def make_params(key):
    ks = jax.random.split(key, 6)
    return {
        'emb':   jax.random.normal(ks[0], (VOCAB, EMB), jnp.float32) * 0.1,
        'gamma': jnp.ones((1, C), jnp.float32),
        'beta':  jnp.zeros((1, C), jnp.float32),
        # weights stored pre-transposed as [in, out] so the kernel does x @ W + b
        'w_hie': jax.random.normal(ks[1], (C, NCLASSES), jnp.float32) * 0.1,
        'b_hie': jax.random.normal(ks[2], (1, NCLASSES), jnp.float32) * 0.01,
        'w_out': jax.random.normal(ks[3], (NCLASSES, NCLASSES), jnp.float32) * 0.1,
        'b_out': jax.random.normal(ks[4], (1, NCLASSES), jnp.float32) * 0.01,
    }


def pack_params(p):
    # pack every parameter into one contiguous [PARAM_ROWS, 128] f32 slab
    slab = jnp.zeros((PARAM_ROWS, LANES), jnp.float32)
    slab = slab.at[R_EMB:R_EMB + VOCAB, :EMB].set(p['emb'])
    slab = slab.at[R_GAMMA, :C].set(p['gamma'].reshape(C))
    slab = slab.at[R_BETA, :C].set(p['beta'].reshape(C))
    slab = slab.at[R_WH:R_WH + C, :NCLASSES].set(p['w_hie'])
    slab = slab.at[R_BH, :NCLASSES].set(p['b_hie'].reshape(NCLASSES))
    slab = slab.at[R_WO:R_WO + NCLASSES, :NCLASSES].set(p['w_out'])
    slab = slab.at[R_BO, :NCLASSES].set(p['b_out'].reshape(NCLASSES))
    return slab


def deepgo_reference(data, p):
    # pure-JAX reference of the same forward (for tolerance check)
    tok = jnp.round(data[:, :MAXLEN]).astype(jnp.int32)
    inp2 = data[:, MAXLEN:].astype(jnp.float32)
    feature = jnp.mean(p['emb'][tok], axis=1)                     # [B, EMB]
    merged = jnp.concatenate([feature, inp2], axis=1)             # [B, C]
    mean = jnp.mean(merged, axis=0, keepdims=True)
    var = jnp.mean((merged - mean) ** 2, axis=0, keepdims=True)
    normed = (merged - mean) * jax.lax.rsqrt(var + BN_EPS)
    normed = normed * p['gamma'] + p['beta']
    x2 = jax.nn.sigmoid(normed @ p['w_hie'] + p['b_hie'])
    return x2 @ p['w_out'] + p['b_out']


if __name__ == "__main__":
    key = jax.random.PRNGKey(0)
    k_tok, k_feat, k_par = jax.random.split(key, 3)

    # data = [token-id columns | dense feature columns], as one float matrix
    tok_cols = jax.random.randint(k_tok, (B, MAXLEN), 0, VOCAB).astype(jnp.float32)
    feat_cols = jax.random.normal(k_feat, (B, C2), jnp.float32)
    data = jnp.concatenate([tok_cols, feat_cols], axis=1)         # [B, MAXLEN + C2]

    params = make_params(k_par)
    param_slab = pack_params(params)

    out = deepgo_forward(data, param_slab)
    jax.block_until_ready(out)

    ref = deepgo_reference(data, params)
    assert out.shape == (B, NCLASSES)
    assert jnp.all(jnp.isfinite(out))
    assert jnp.allclose(out, ref, rtol=1e-4, atol=1e-4), \
        float(jnp.max(jnp.abs(out - ref)))
    print("KERNEL_OK")
</pallas_src>

<mosaic_0001>
module attributes {stable_mosaic.version = 11 : i64} {
  func.func @deepgo_kernel(%arg0: memref<8x40xf32, #tpu.memory_space<vmem>>, %arg1: memref<160x128xf32, #tpu.memory_space<vmem>>, %arg2: memref<8x128xf32, #tpu.memory_space<vmem>>) attributes {dimension_semantics = [], scalar_prefetch = 0 : i64, scratch_operands = 0 : i64, tpu.core_type = #tpu.core_type<tc>} {
    %c0 = arith.constant 0 : index
    %c0_0 = arith.constant 0 : index
    %0 = vector.load %arg0[%c0, %c0_0] : memref<8x40xf32, #tpu.memory_space<vmem>>, vector<8x40xf32>
    %1 = vector.extract_strided_slice %0 {offsets = [0, 0], sizes = [8, 8], strides = [1, 1]} : vector<8x40xf32> to vector<8x8xf32>
    %2 = math.roundeven %1 : vector<8x8xf32>
    %3 = arith.fptosi %2 : vector<8x8xf32> to vector<8x8xi32>
    %4 = vector.extract_strided_slice %0 {offsets = [0, 8], sizes = [8, 32], strides = [1, 1]} : vector<8x40xf32> to vector<8x32xf32>
    %5 = tpu.iota {dimensions = array<i32: 1>} : vector<8x32xi32>
    %cst = arith.constant 0.000000e+00 : f32
    %6 = vector.broadcast %cst : f32 to vector<8x32xf32>
    %7 = vector.extract_strided_slice %3 {offsets = [0, 0], sizes = [8, 1], strides = [1, 1]} : vector<8x8xi32> to vector<8x1xi32>
    %8 = vector.broadcast %7 : vector<8x1xi32> to vector<8x32xi32>
    %9 = arith.cmpi eq, %8, %5 : vector<8x32xi32>
    %10 = arith.extui %9 : vector<8x32xi1> to vector<8x32xi32>
    %11 = arith.sitofp %10 : vector<8x32xi32> to vector<8x32xf32>
    %12 = arith.addf %6, %11 : vector<8x32xf32>
    %13 = vector.extract_strided_slice %3 {offsets = [0, 1], sizes = [8, 1], strides = [1, 1]} : vector<8x8xi32> to vector<8x1xi32>
    %14 = vector.broadcast %13 : vector<8x1xi32> to vector<8x32xi32>
    %15 = arith.cmpi eq, %14, %5 : vector<8x32xi32>
    %16 = arith.extui %15 : vector<8x32xi1> to vector<8x32xi32>
    %17 = arith.sitofp %16 : vector<8x32xi32> to vector<8x32xf32>
    %18 = arith.addf %12, %17 : vector<8x32xf32>
    %19 = vector.extract_strided_slice %3 {offsets = [0, 2], sizes = [8, 1], strides = [1, 1]} : vector<8x8xi32> to vector<8x1xi32>
    %20 = vector.broadcast %19 : vector<8x1xi32> to vector<8x32xi32>
    %21 = arith.cmpi eq, %20, %5 : vector<8x32xi32>
    %22 = arith.extui %21 : vector<8x32xi1> to vector<8x32xi32>
    %23 = arith.sitofp %22 : vector<8x32xi32> to vector<8x32xf32>
    %24 = arith.addf %18, %23 : vector<8x32xf32>
    %25 = vector.extract_strided_slice %3 {offsets = [0, 3], sizes = [8, 1], strides = [1, 1]} : vector<8x8xi32> to vector<8x1xi32>
    %26 = vector.broadcast %25 : vector<8x1xi32> to vector<8x32xi32>
    %27 = arith.cmpi eq, %26, %5 : vector<8x32xi32>
    %28 = arith.extui %27 : vector<8x32xi1> to vector<8x32xi32>
    %29 = arith.sitofp %28 : vector<8x32xi32> to vector<8x32xf32>
    %30 = arith.addf %24, %29 : vector<8x32xf32>
    %31 = vector.extract_strided_slice %3 {offsets = [0, 4], sizes = [8, 1], strides = [1, 1]} : vector<8x8xi32> to vector<8x1xi32>
    %32 = vector.broadcast %31 : vector<8x1xi32> to vector<8x32xi32>
    %33 = arith.cmpi eq, %32, %5 : vector<8x32xi32>
    %34 = arith.extui %33 : vector<8x32xi1> to vector<8x32xi32>
    %35 = arith.sitofp %34 : vector<8x32xi32> to vector<8x32xf32>
    %36 = arith.addf %30, %35 : vector<8x32xf32>
    %37 = vector.extract_strided_slice %3 {offsets = [0, 5], sizes = [8, 1], strides = [1, 1]} : vector<8x8xi32> to vector<8x1xi32>
    %38 = vector.broadcast %37 : vector<8x1xi32> to vector<8x32xi32>
    %39 = arith.cmpi eq, %38, %5 : vector<8x32xi32>
    %40 = arith.extui %39 : vector<8x32xi1> to vector<8x32xi32>
    %41 = arith.sitofp %40 : vector<8x32xi32> to vector<8x32xf32>
    %42 = arith.addf %36, %41 : vector<8x32xf32>
    %43 = vector.extract_strided_slice %3 {offsets = [0, 6], sizes = [8, 1], strides = [1, 1]} : vector<8x8xi32> to vector<8x1xi32>
    %44 = vector.broadcast %43 : vector<8x1xi32> to vector<8x32xi32>
    %45 = arith.cmpi eq, %44, %5 : vector<8x32xi32>
    %46 = arith.extui %45 : vector<8x32xi1> to vector<8x32xi32>
    %47 = arith.sitofp %46 : vector<8x32xi32> to vector<8x32xf32>
    %48 = arith.addf %42, %47 : vector<8x32xf32>
    %49 = vector.extract_strided_slice %3 {offsets = [0, 7], sizes = [8, 1], strides = [1, 1]} : vector<8x8xi32> to vector<8x1xi32>
    %50 = vector.broadcast %49 : vector<8x1xi32> to vector<8x32xi32>
    %51 = arith.cmpi eq, %50, %5 : vector<8x32xi32>
    %52 = arith.extui %51 : vector<8x32xi1> to vector<8x32xi32>
    %53 = arith.sitofp %52 : vector<8x32xi32> to vector<8x32xf32>
    %54 = arith.addf %48, %53 : vector<8x32xf32>
    %c0_1 = arith.constant 0 : index
    %c0_2 = arith.constant 0 : index
    %55 = vector.load %arg1[%c0_1, %c0_2] : memref<160x128xf32, #tpu.memory_space<vmem>>, vector<32x32xf32>
    %cst_3 = arith.constant 1.250000e-01 : f32
    %56 = vector.broadcast %cst_3 : f32 to vector<8x32xf32>
    %57 = arith.mulf %54, %56 : vector<8x32xf32>
    %cst_4 = arith.constant dense<0.000000e+00> : vector<8x32xf32>
    %58 = tpu.matmul %57, %55, %cst_4 {dimension_numbers = #tpu.dot_dimension_numbers<[1], [0], [0], [1], [0, 0, 1, 1], [], []>} : vector<8x32xf32>, vector<32x32xf32>, vector<8x32xf32> -> vector<8x32xf32>
    %c32 = arith.constant 32 : index
    %c0_5 = arith.constant 0 : index
    %59 = vector.load %arg1[%c32, %c0_5] : memref<160x128xf32, #tpu.memory_space<vmem>>, vector<1x64xf32>
    %c40 = arith.constant 40 : index
    %c0_6 = arith.constant 0 : index
    %60 = vector.load %arg1[%c40, %c0_6] : memref<160x128xf32, #tpu.memory_space<vmem>>, vector<1x64xf32>
    %61 = vector.extract_strided_slice %59 {offsets = [0, 0], sizes = [1, 32], strides = [1, 1]} : vector<1x64xf32> to vector<1x32xf32>
    %62 = vector.extract_strided_slice %60 {offsets = [0, 0], sizes = [1, 32], strides = [1, 1]} : vector<1x64xf32> to vector<1x32xf32>
    %cst_7 = arith.constant dense<0.000000e+00> : vector<32xf32>
    %63 = vector.multi_reduction <add>, %58, %cst_7 [0] : vector<8x32xf32> to vector<32xf32>
    %64 = vector.shape_cast %63 : vector<32xf32> to vector<1x32xf32>
    %cst_8 = arith.constant 8.000000e+00 : f32
    %65 = vector.broadcast %cst_8 : f32 to vector<1x32xf32>
    %66 = arith.divf %64, %65 : vector<1x32xf32>
    %67 = vector.broadcast %66 : vector<1x32xf32> to vector<8x32xf32>
    %68 = arith.subf %58, %67 : vector<8x32xf32>
    %69 = arith.mulf %68, %68 : vector<8x32xf32>
    %cst_9 = arith.constant dense<0.000000e+00> : vector<32xf32>
    %70 = vector.multi_reduction <add>, %69, %cst_9 [0] : vector<8x32xf32> to vector<32xf32>
    %71 = vector.shape_cast %70 : vector<32xf32> to vector<1x32xf32>
    %cst_10 = arith.constant 8.000000e+00 : f32
    %72 = vector.broadcast %cst_10 : f32 to vector<1x32xf32>
    %73 = arith.divf %71, %72 : vector<1x32xf32>
    %74 = vector.broadcast %66 : vector<1x32xf32> to vector<8x32xf32>
    %75 = arith.subf %58, %74 : vector<8x32xf32>
    %cst_11 = arith.constant 9.99999974E-6 : f32
    %76 = vector.broadcast %cst_11 : f32 to vector<1x32xf32>
    %77 = arith.addf %73, %76 : vector<1x32xf32>
    %78 = math.rsqrt %77 : vector<1x32xf32>
    %79 = vector.broadcast %78 : vector<1x32xf32> to vector<8x32xf32>
    %80 = arith.mulf %75, %79 : vector<8x32xf32>
    %81 = vector.broadcast %61 : vector<1x32xf32> to vector<8x32xf32>
    %82 = arith.mulf %80, %81 : vector<8x32xf32>
    %83 = vector.broadcast %62 : vector<1x32xf32> to vector<8x32xf32>
    %84 = arith.addf %82, %83 : vector<8x32xf32>
    %85 = vector.extract_strided_slice %59 {offsets = [0, 32], sizes = [1, 32], strides = [1, 1]} : vector<1x64xf32> to vector<1x32xf32>
    %86 = vector.extract_strided_slice %60 {offsets = [0, 32], sizes = [1, 32], strides = [1, 1]} : vector<1x64xf32> to vector<1x32xf32>
    %cst_12 = arith.constant dense<0.000000e+00> : vector<32xf32>
    %87 = vector.multi_reduction <add>, %4, %cst_12 [0] : vector<8x32xf32> to vector<32xf32>
    %88 = vector.shape_cast %87 : vector<32xf32> to vector<1x32xf32>
    %cst_13 = arith.constant 8.000000e+00 : f32
    %89 = vector.broadcast %cst_13 : f32 to vector<1x32xf32>
    %90 = arith.divf %88, %89 : vector<1x32xf32>
    %91 = vector.broadcast %90 : vector<1x32xf32> to vector<8x32xf32>
    %92 = arith.subf %4, %91 : vector<8x32xf32>
    %93 = arith.mulf %92, %92 : vector<8x32xf32>
    %cst_14 = arith.constant dense<0.000000e+00> : vector<32xf32>
    %94 = vector.multi_reduction <add>, %93, %cst_14 [0] : vector<8x32xf32> to vector<32xf32>
    %95 = vector.shape_cast %94 : vector<32xf32> to vector<1x32xf32>
    %cst_15 = arith.constant 8.000000e+00 : f32
    %96 = vector.broadcast %cst_15 : f32 to vector<1x32xf32>
    %97 = arith.divf %95, %96 : vector<1x32xf32>
    %98 = vector.broadcast %90 : vector<1x32xf32> to vector<8x32xf32>
    %99 = arith.subf %4, %98 : vector<8x32xf32>
    %cst_16 = arith.constant 9.99999974E-6 : f32
    %100 = vector.broadcast %cst_16 : f32 to vector<1x32xf32>
    %101 = arith.addf %97, %100 : vector<1x32xf32>
    %102 = math.rsqrt %101 : vector<1x32xf32>
    %103 = vector.broadcast %102 : vector<1x32xf32> to vector<8x32xf32>
    %104 = arith.mulf %99, %103 : vector<8x32xf32>
    %105 = vector.broadcast %85 : vector<1x32xf32> to vector<8x32xf32>
    %106 = arith.mulf %104, %105 : vector<8x32xf32>
    %107 = vector.broadcast %86 : vector<1x32xf32> to vector<8x32xf32>
    %108 = arith.addf %106, %107 : vector<8x32xf32>
    %c48 = arith.constant 48 : index
    %c0_17 = arith.constant 0 : index
    %109 = vector.load %arg1[%c48, %c0_17] : memref<160x128xf32, #tpu.memory_space<vmem>>, vector<32x32xf32>
    %c80 = arith.constant 80 : index
    %c0_18 = arith.constant 0 : index
    %110 = vector.load %arg1[%c80, %c0_18] : memref<160x128xf32, #tpu.memory_space<vmem>>, vector<32x32xf32>
    %c112 = arith.constant 112 : index
    %c0_19 = arith.constant 0 : index
    %111 = vector.load %arg1[%c112, %c0_19] : memref<160x128xf32, #tpu.memory_space<vmem>>, vector<1x32xf32>
    %cst_20 = arith.constant dense<0.000000e+00> : vector<8x32xf32>
    %112 = tpu.matmul %84, %109, %cst_20 {dimension_numbers = #tpu.dot_dimension_numbers<[1], [0], [0], [1], [0, 0, 1, 1], [], []>} : vector<8x32xf32>, vector<32x32xf32>, vector<8x32xf32> -> vector<8x32xf32>
    %cst_21 = arith.constant dense<0.000000e+00> : vector<8x32xf32>
    %113 = tpu.matmul %108, %110, %cst_21 {dimension_numbers = #tpu.dot_dimension_numbers<[1], [0], [0], [1], [0, 0, 1, 1], [], []>} : vector<8x32xf32>, vector<32x32xf32>, vector<8x32xf32> -> vector<8x32xf32>
    %114 = arith.addf %112, %113 : vector<8x32xf32>
    %115 = vector.broadcast %111 : vector<1x32xf32> to vector<8x32xf32>
    %116 = arith.addf %114, %115 : vector<8x32xf32>
    %117 = arith.negf %116 : vector<8x32xf32>
    %118 = math.exp %117 : vector<8x32xf32>
    %cst_22 = arith.constant 1.000000e+00 : f32
    %119 = vector.broadcast %cst_22 : f32 to vector<8x32xf32>
    %120 = arith.addf %119, %118 : vector<8x32xf32>
    %121 = arith.divf %119, %120 : vector<8x32xf32>
    %c120 = arith.constant 120 : index
    %c0_23 = arith.constant 0 : index
    %122 = vector.load %arg1[%c120, %c0_23] : memref<160x128xf32, #tpu.memory_space<vmem>>, vector<32x128xf32>
    %c152 = arith.constant 152 : index
    %c0_24 = arith.constant 0 : index
    %123 = vector.load %arg1[%c152, %c0_24] : memref<160x128xf32, #tpu.memory_space<vmem>>, vector<1x128xf32>
    %cst_25 = arith.constant dense<0.000000e+00> : vector<8x128xf32>
    %124 = tpu.matmul %121, %122, %cst_25 {dimension_numbers = #tpu.dot_dimension_numbers<[1], [0], [0], [1], [0, 0, 1, 1], [], []>} : vector<8x32xf32>, vector<32x128xf32>, vector<8x128xf32> -> vector<8x128xf32>
    %125 = vector.broadcast %123 : vector<1x128xf32> to vector<8x128xf32>
    %126 = arith.addf %124, %125 : vector<8x128xf32>
    %c0_26 = arith.constant 0 : index
    %c0_27 = arith.constant 0 : index
    %127 = vector.load %arg2[%c0_26, %c0_27] : memref<8x128xf32, #tpu.memory_space<vmem>>, vector<8x128xf32>
    tpu.vector_store %arg2[%c0_26, %c0_27], %126 {strides = array<i32>} : memref<8x128xf32, #tpu.memory_space<vmem>>, vector<8x128xf32>,
    return
  }
}

</mosaic_0001>

<llo_original>
// kernel: deepgo_forward.1
$region0: #{deepgo_forward.1}
  #allocation0 [shape = 'u32[]', space=smem, size = 0x4, offset = 0x4, fixed_abs, tag = 'smem constant byte address 0x4 - core index']
  #allocation1 [shape = 'u32[144,128]{1,0:T(1,128)}', space=vmem, size = 0x12000, scoped, tag = 'internal scratch']
  %s0 = inlined_call_operand.hbm [shape: f32[8,40], index: 0, kind: input, shape index: {}]
  %s1 = inlined_call_operand.hbm [shape: f32[160,128], index: 1, kind: input, shape index: {}]
  %s2 = inlined_call_operand.hbm [shape: f32[8,128], index: 2, kind: output, shape index: {}]
  %s3 = sld [smem:[#allocation0]]
  $region26: #{deepgo_forward.1} parent=0
    _
  %s5 = ssub.s32 1, %s3
  %s6 = scalar_select 0, %s5, %s3
  $region1: #{deepgo_forward.1} parent=0
    #allocation2 [shape = 'u8[4096]{0}', space=vmem, size = 0x1000, scoped, tag = 'input window, operand 0, single buffered']
    #allocation3 [shape = 's32[1]{0}', space=sflag, size = 0x4, scoped, tag = 'scoped memory for deepgo_forward.1']
    #allocation4 [shape = 's32[1]{0}', space=sflag, size = 0x4, scoped, tag = 'scoped memory for deepgo_forward.1']
    #allocation5 [shape = 'u8[81920]{0}', space=vmem, size = 0x14000, scoped, tag = 'input window, operand 1, single buffered']
    #allocation6 [shape = 's32[1]{0}', space=sflag, size = 0x4, scoped, tag = 'scoped memory for deepgo_forward.1']
    #allocation7 [shape = 'u8[4096]{0}', space=vmem, size = 0x1000, scoped, tag = 'output window, operand 0, single buffered']
    %7 = vsyncpa [#allocation3], 0
    %8 = vsyncpa [#allocation6], 0
    %9 = vsyncpa [#allocation4], 0
    // Predicated region
    $region2: #{deepgo_forward.1} parent=1 // pred_check
      _
    $region3: #{deepgo_forward.1} parent=1 // pred_check_branch
      %11 = sbr.rel (0) target = $region5
    $region4: #{deepgo_forward.1} parent=1 // pred_region
      %s13 = ssub.s32 128, 128
      %14 = vsyncadd [#allocation3], %s13
      %s16 = sshll.u32 [#allocation2], 4
      %s17 = int_to_ptr.vmem [resolvable:$true] %s16
      %19 = dma.hbm_to_vmem [thread:$0]  %s0, 128, %s17, [#allocation3]
    $region5: #{deepgo_forward.1} parent=1 // pred_fallthru
      _
    // Predicated region
    $region6: #{deepgo_forward.1} parent=1 // pred_check
      _
    $region7: #{deepgo_forward.1} parent=1 // pred_check_branch
      %21 = sbr.rel (0) target = $region9
    $region8: #{deepgo_forward.1} parent=1 // pred_region
      %s23 = ssub.s32 2560, 2560
      %24 = vsyncadd [#allocation6], %s23
      %s25 = sshll.u32 [#allocation5], 4
      %s26 = int_to_ptr.vmem [resolvable:$true] %s25
      %31 = dma.hbm_to_vmem [thread:$0]  %s1, 2560, %s26, [#allocation6], 128, 128, 8
    $region9: #{deepgo_forward.1} parent=1 // pred_fallthru
      _
    // Predicated region
    $region10: #{deepgo_forward.1} parent=1 // pred_check
      _
    $region11: #{deepgo_forward.1} parent=1 // pred_check_branch
      %33 = sbr.rel (0) target = $region13
    $region12: #{deepgo_forward.1} parent=1 // pred_region
      %34 = dma.done [#allocation3], 128
    $region13: #{deepgo_forward.1} parent=1 // pred_fallthru
      _
    // Predicated region
    $region14: #{deepgo_forward.1} parent=1 // pred_check
      _
    $region15: #{deepgo_forward.1} parent=1 // pred_check_branch
      %36 = sbr.rel (0) target = $region17
    $region16: #{deepgo_forward.1} parent=1 // pred_region
      %37 = dma.done [#allocation6], 2560
    $region17: #{deepgo_forward.1} parent=1 // pred_fallthru
      _
    %v38 = vld [vmem:[#allocation2] sm:$0xff]
    %v39 = vcvt.f32.s32.ties.to.even %v38
    %v40 = vlaneseq
    %v41 = vand.u32 %v40, 127
    %42 = vset.pattern.permute.xlu0 0
    %43 = vperm.xlu0 %42, %v39
    %v44 = vpop.permute.xlu0 %43
    %vm45 = vcmp.eq.s32.totalorder %v44, %v41
    %v46 = vsel %vm45, 1, 0
    %v47 = vcvt.s32.f32 %v46
    %v48 = vadd.f32 %v47, 0.0
    %49 = vset.pattern.permute.xlu0 1
    %50 = vperm.xlu0 %49, %v39
    %v51 = vpop.permute.xlu0 %50
    %vm52 = vcmp.eq.s32.totalorder %v51, %v41
    %v53 = vsel %vm52, 1, 0
    %v54 = vcvt.s32.f32 %v53
    %v55 = vadd.f32 %v48, %v54
    %56 = vset.pattern.permute.xlu0 2
    %57 = vperm.xlu0 %56, %v39
    %v58 = vpop.permute.xlu0 %57
    %vm59 = vcmp.eq.s32.totalorder %v58, %v41
    %v60 = vsel %vm59, 1, 0
    %v61 = vcvt.s32.f32 %v60
    %v62 = vadd.f32 %v55, %v61
    %63 = vset.pattern.permute.xlu0 3
    %64 = vperm.xlu0 %63, %v39
    %v65 = vpop.permute.xlu0 %64
    %vm66 = vcmp.eq.s32.totalorder %v65, %v41
    %v67 = vsel %vm66, 1, 0
    %v68 = vcvt.s32.f32 %v67
    %v69 = vadd.f32 %v62, %v68
    %70 = vset.pattern.permute.xlu0 4
    %71 = vperm.xlu0 %70, %v39
    %v72 = vpop.permute.xlu0 %71
    %vm73 = vcmp.eq.s32.totalorder %v72, %v41
    %v74 = vsel %vm73, 1, 0
    %v75 = vcvt.s32.f32 %v74
    %v76 = vadd.f32 %v69, %v75
    %77 = vset.pattern.permute.xlu0 5
    %78 = vperm.xlu0 %77, %v39
    %v79 = vpop.permute.xlu0 %78
    %vm80 = vcmp.eq.s32.totalorder %v79, %v41
    %v81 = vsel %vm80, 1, 0
    %v82 = vcvt.s32.f32 %v81
    %v83 = vadd.f32 %v76, %v82
    %84 = vset.pattern.permute.xlu0 6
    %85 = vperm.xlu0 %84, %v39
    %v86 = vpop.permute.xlu0 %85
    %vm87 = vcmp.eq.s32.totalorder %v86, %v41
    %v88 = vsel %vm87, 1, 0
    %v89 = vcvt.s32.f32 %v88
    %v90 = vadd.f32 %v83, %v89
    %91 = vset.pattern.permute.xlu0 7
    %92 = vperm.xlu0 %91, %v39
    %v93 = vpop.permute.xlu0 %92
    %vm94 = vcmp.eq.s32.totalorder %v93, %v41
    %v95 = vsel %vm94, 1, 0
    %v96 = vcvt.s32.f32 %v95
    %v97 = vadd.f32 %v90, %v96
    %v98 = vld [vmem:[#allocation5] sm:$0xff]
    %v99 = vld [vmem:[#allocation5 + $0x8] sm:$0xff]
    %v100 = vld [vmem:[#allocation5 + $0x10] sm:$0xff]
    %v101 = vld [vmem:[#allocation5 + $0x18] sm:$0xff]
    %v102 = vmul.f32 %v97, 0.125
    %vm103 = vcmask 261120
    %v105 = vsel %vm103, %v102, 0
    %107 = vmatprep.subr.mxu0 0.0
    %108 = vmatpush1.msra.mxu0 %v98
    %109 = vmatprep.subr.mxu0 0.0
    %110 = vmatpush1.msra.mxu0 %v99
    %111 = vmatprep.subr.mxu0 0.0
    %112 = vmatpush1.msra.mxu0 %v100
    %113 = vmatprep.subr.mxu0 0.0
    %114 = vmatpush1.msra.mxu0 %v101
    %115 = vmatprep.subr.mxu0 0.0
    %116 = vmatpush1.msra.mxu0 0.0
    %117 = vmatprep.subr.mxu0 0.0
    %118 = vmatpush1.msra.mxu0 0.0
    %119 = vmatprep.subr.mxu0 0.0
    %120 = vmatpush1.msra.mxu0 0.0
    %121 = vmatprep.subr.mxu0 0.0
    %122 = vmatpush1.msra.mxu0 0.0
    %123 = vmatprep.subr.mxu0 0.0
    %124 = vmatpush1.msra.mxu0 0.0
    %125 = vmatprep.subr.mxu0 0.0
    %126 = vmatpush1.msra.mxu0 0.0
    %127 = vmatprep.subr.mxu0 0.0
    %128 = vmatpush1.msra.mxu0 0.0
    %129 = vmatprep.subr.mxu0 0.0
    %130 = vmatpush1.msra.mxu0 0.0
    %131 = vmatprep.subr.mxu0 0.0
    %132 = vmatpush1.msra.mxu0 0.0
    %133 = vmatprep.subr.mxu0 0.0
    %134 = vmatpush1.msra.mxu0 0.0
    %135 = vmatprep.subr.mxu0 0.0
    %136 = vmatpush1.msra.mxu0 0.0
    %137 = vmatprep.subr.mxu0 0.0
    %138 = vmatpush1.msra.mxu0 0.0
    %139 = vmatprep.subr.mxu0 0.0
    %140 = vmatpush1.msra.mxu0 0.0
    %141 = vmatprep.subr.mxu0 0.0
    %142 = vmatpush1.msra.mxu0 0.0
    %143 = vmatprep.subr.mxu0 0.0
    %144 = vmatpush1.msra.mxu0 0.0
    %145 = vmatprep.subr.mxu0 0.0
    %146 = vmatpush1.msra.mxu0 0.0
    %147 = vmatprep.subr.mxu0 0.0
    %148 = vmatpush1.msra.mxu0 0.0
    %149 = vmatprep.subr.mxu0 0.0
    %150 = vmatpush1.msra.mxu0 0.0
    %151 = vmatprep.subr.mxu0 0.0
    %152 = vmatpush1.msra.mxu0 0.0
    %153 = vmatprep.subr.mxu0 0.0
    %154 = vmatpush1.msra.mxu0 0.0
    %155 = vmatprep.subr.mxu0 0.0
    %156 = vmatpush1.msra.mxu0 0.0
    %157 = vmatprep.subr.mxu0 0.0
    %158 = vmatpush1.msra.mxu0 0.0
    %159 = vmatprep.subr.mxu0 0.0
    %160 = vmatpush1.msra.mxu0 0.0
    %161 = vmatprep.subr.mxu0 0.0
    %162 = vmatpush1.msra.mxu0 0.0
    %163 = vmatprep.subr.mxu0 0.0
    %164 = vmatpush1.msra.mxu0 0.0
    %165 = vmatprep.subr.mxu0 0.0
    %166 = vmatpush1.msra.mxu0 0.0
    %167 = vmatprep.subr.mxu0 0.0
    %168 = vmatpush1.msra.mxu0 0.0
    %169 = vmatprep.subr.mxu0 0.0
    %170 = vmatpush1.msra.mxu0 0.0
    %171 = vmatprep.mubr.f32.mxu0 0.0
    %172 = vmatmul.mubr.f32.gmra.mrb[0].mxu0 %v105
    %v173 = vpop.f32.mrb[0].mxu0
    %v174 = vadd.f32 0.0, %v173
    %v175 = vpop.f32.mrb[0].mxu0
    %176 = vdwg.mxu0
    %v177 = vld [vmem:[#allocation5 + $0x20] sm:$0x1]
    %v178 = vld [vmem:[#allocation5 + $0x28] sm:$0x1]
    %v179 = vsel %vm103, %v174, 0.0
    %v180 = vrot.slane %v179, 4
    %v181 = vadd.f32 %v179, %v180
    %v182 = vrot.slane %v181, 2
    %v183 = vadd.f32 %v181, %v182
    %v184 = vrot.slane %v183, 1
    %v185 = vadd.f32 %v183, %v184
    %v186 = vrcp.pop 8.0
    %v187 = vmul.f32 %v185, %v186
    %v188 = vsub.f32 %v174, %v187
    %v189 = vmul.f32 %v188, %v188
    %v190 = vsel %vm103, %v189, 0.0
    %v191 = vrot.slane %v190, 4
    %v192 = vadd.f32 %v190, %v191
    %v193 = vrot.slane %v192, 2
    %v194 = vadd.f32 %v192, %v193
    %v195 = vrot.slane %v194, 1
    %v196 = vadd.f32 %v194, %v195
    %v197 = vmul.f32 %v196, %v186
    %v198 = vadd.f32 %v197, 1e-05
    %v199 = vrsqrt.pop %v198
    %v200 = vmul.f32 %v188, %v199
    %v201 = vlaneseq
    %v202 = vshrl.u32 %v201, 7
    %v203 = vsub.s32 0, %v202
    %v204 = vrot.slane %v177, %v203
    %v205 = vmul.f32 %v200, %v204
    %v206 = vlaneseq
    %v207 = vshrl.u32 %v206, 7
    %v208 = vsub.s32 0, %v207
    %v209 = vrot.slane %v178, %v208
    %v210 = vadd.f32 %v205, %v209
    %vm211 = vcmask 326720
    %v212 = vsel %vm211, %v38, 0.0
    %v213 = vrot.slane %v212, 4
    %v214 = vadd.f32 %v212, %v213
    %v215 = vrot.slane %v214, 2
    %v216 = vadd.f32 %v214, %v215
    %v217 = vrot.slane %v216, 1
    %v218 = vadd.f32 %v216, %v217
    %v219 = vmul.f32 %v218, %v186
    %v220 = vsub.f32 %v38, %v219
    %v221 = vmul.f32 %v220, %v220
    %v222 = vsel %vm211, %v221, 0.0
    %v223 = vrot.slane %v222, 4
    %v224 = vadd.f32 %v222, %v223
    %v225 = vrot.slane %v224, 2
    %v226 = vadd.f32 %v224, %v225
    %v227 = vrot.slane %v226, 1
    %v228 = vadd.f32 %v226, %v227
    %v229 = vmul.f32 %v228, %v186
    %v230 = vadd.f32 %v229, 1e-05
    %v231 = vrsqrt.pop %v230
    %v232 = vmul.f32 %v220, %v231
    %234 = vrot.lane.b32.xlu0 %v204, 104
    %v235 = vpop.permute.xlu0 %234
    %v237 = vmul.f32 %v232, %v235
    %239 = vrot.lane.b32.xlu0 %v209, 104
    %v240 = vpop.permute.xlu0 %239
    %v242 = vadd.f32 %v237, %v240
    %v243 = vld [vmem:[#allocation5 + $0x30] sm:$0xff]
    %v244 = vld [vmem:[#allocation5 + $0x38] sm:$0xff]
    %v245 = vld [vmem:[#allocation5 + $0x40] sm:$0xff]
    %v246 = vld [vmem:[#allocation5 + $0x48] sm:$0xff]
    %v247 = vld [vmem:[#allocation5 + $0x50] sm:$0xff]
    %v248 = vld [vmem:[#allocation5 + $0x58] sm:$0xff]
    %v249 = vld [vmem:[#allocation5 + $0x60] sm:$0xff]
    %v250 = vld [vmem:[#allocation5 + $0x68] sm:$0xff]
    %v251 = vld [vmem:[#allocation5 + $0x70] sm:$0x1]
    %253 = vrot.lane.b32.xlu0 %v242, 120
    %v254 = vpop.permute.xlu0 %253
    %v255 = vsel %vm103, %v254, 0
    %257 = vmatprep.subr.mxu0 0.0
    %258 = vmatpush1.msra.mxu0 %v247
    %259 = vmatprep.subr.mxu0 0.0
    %260 = vmatpush1.msra.mxu0 %v248
    %261 = vmatprep.subr.mxu0 0.0
    %262 = vmatpush1.msra.mxu0 %v249
    %263 = vmatprep.subr.mxu0 0.0
    %264 = vmatpush1.msra.mxu0 %v250
    %265 = vmatprep.subr.mxu0 0.0
    %266 = vmatpush1.msra.mxu0 0.0
    %267 = vmatprep.subr.mxu0 0.0
    %268 = vmatpush1.msra.mxu0 0.0
    %269 = vmatprep.subr.mxu0 0.0
    %270 = vmatpush1.msra.mxu0 0.0
    %271 = vmatprep.subr.mxu0 0.0
    %272 = vmatpush1.msra.mxu0 0.0
    %273 = vmatprep.subr.mxu0 0.0
    %274 = vmatpush1.msra.mxu0 0.0
    %275 = vmatprep.subr.mxu0 0.0
    %276 = vmatpush1.msra.mxu0 0.0
    %277 = vmatprep.subr.mxu0 0.0
    %278 = vmatpush1.msra.mxu0 0.0
    %279 = vmatprep.subr.mxu0 0.0
    %280 = vmatpush1.msra.mxu0 0.0
    %281 = vmatprep.subr.mxu0 0.0
    %282 = vmatpush1.msra.mxu0 0.0
    %283 = vmatprep.subr.mxu0 0.0
    %284 = vmatpush1.msra.mxu0 0.0
    %285 = vmatprep.subr.mxu0 0.0
    %286 = vmatpush1.msra.mxu0 0.0
    %287 = vmatprep.subr.mxu0 0.0
    %288 = vmatpush1.msra.mxu0 0.0
    %289 = vmatprep.subr.mxu0 0.0
    %290 = vmatpush1.msra.mxu0 0.0
    %291 = vmatprep.subr.mxu0 0.0
    %292 = vmatpush1.msra.mxu0 0.0
    %293 = vmatprep.subr.mxu0 0.0
    %294 = vmatpush1.msra.mxu0 0.0
    %295 = vmatprep.subr.mxu0 0.0
    %296 = vmatpush1.msra.mxu0 0.0
    %297 = vmatprep.subr.mxu0 0.0
    %298 = vmatpush1.msra.mxu0 0.0
    %299 = vmatprep.subr.mxu0 0.0
    %300 = vmatpush1.msra.mxu0 0.0
    %301 = vmatprep.subr.mxu0 0.0
    %302 = vmatpush1.msra.mxu0 0.0
    %303 = vmatprep.subr.mxu0 0.0
    %304 = vmatpush1.msra.mxu0 0.0
    %305 = vmatprep.subr.mxu0 0.0
    %306 = vmatpush1.msra.mxu0 0.0
    %307 = vmatprep.subr.mxu0 0.0
    %308 = vmatpush1.msra.mxu0 0.0
    %309 = vmatprep.subr.mxu0 0.0
    %310 = vmatpush1.msra.mxu0 0.0
    %311 = vmatprep.subr.mxu0 0.0
    %312 = vmatpush1.msra.mxu0 0.0
    %313 = vmatprep.subr.mxu0 0.0
    %314 = vmatpush1.msra.mxu0 0.0
    %315 = vmatprep.subr.mxu0 0.0
    %316 = vmatpush1.msra.mxu0 0.0
    %317 = vmatprep.subr.mxu0 0.0
    %318 = vmatpush1.msra.mxu0 0.0
    %319 = vmatprep.subr.mxu0 0.0
    %320 = vmatpush1.msra.mxu0 0.0
    %321 = vmatprep.mubr.f32.mxu0 0.0
    %322 = vmatmul.mubr.f32.gmra.mrb[0].mxu0 %v255
    %v323 = vpop.f32.mrb[0].mxu0
    %v324 = vadd.f32 0.0, %v323
    %v325 = vpop.f32.mrb[0].mxu0
    %326 = vdwg.mxu0
    %v328 = vsel %vm103, %v210, 0
    %330 = vmatprep.subr.mxu0 0.0
    %331 = vmatpush1.msra.mxu0 %v243
    %332 = vmatprep.subr.mxu0 0.0
    %333 = vmatpush1.msra.mxu0 %v244
    %334 = vmatprep.subr.mxu0 0.0
    %335 = vmatpush1.msra.mxu0 %v245
    %336 = vmatprep.subr.mxu0 0.0
    %337 = vmatpush1.msra.mxu0 %v246
    %338 = vmatprep.subr.mxu0 0.0
    %339 = vmatpush1.msra.mxu0 0.0
    %340 = vmatprep.subr.mxu0 0.0
    %341 = vmatpush1.msra.mxu0 0.0
    %342 = vmatprep.subr.mxu0 0.0
    %343 = vmatpush1.msra.mxu0 0.0
    %344 = vmatprep.subr.mxu0 0.0
    %345 = vmatpush1.msra.mxu0 0.0
    %346 = vmatprep.subr.mxu0 0.0
    %347 = vmatpush1.msra.mxu0 0.0
    %348 = vmatprep.subr.mxu0 0.0
    %349 = vmatpush1.msra.mxu0 0.0
    %350 = vmatprep.subr.mxu0 0.0
    %351 = vmatpush1.msra.mxu0 0.0
    %352 = vmatprep.subr.mxu0 0.0
    %353 = vmatpush1.msra.mxu0 0.0
    %354 = vmatprep.subr.mxu0 0.0
    %355 = vmatpush1.msra.mxu0 0.0
    %356 = vmatprep.subr.mxu0 0.0
    %357 = vmatpush1.msra.mxu0 0.0
    %358 = vmatprep.subr.mxu0 0.0
    %359 = vmatpush1.msra.mxu0 0.0
    %360 = vmatprep.subr.mxu0 0.0
    %361 = vmatpush1.msra.mxu0 0.0
    %362 = vmatprep.subr.mxu0 0.0
    %363 = vmatpush1.msra.mxu0 0.0
    %364 = vmatprep.subr.mxu0 0.0
    %365 = vmatpush1.msra.mxu0 0.0
    %366 = vmatprep.subr.mxu0 0.0
    %367 = vmatpush1.msra.mxu0 0.0
    %368 = vmatprep.subr.mxu0 0.0
    %369 = vmatpush1.msra.mxu0 0.0
    %370 = vmatprep.subr.mxu0 0.0
    %371 = vmatpush1.msra.mxu0 0.0
    %372 = vmatprep.subr.mxu0 0.0
    %373 = vmatpush1.msra.mxu0 0.0
    %374 = vmatprep.subr.mxu0 0.0
    %375 = vmatpush1.msra.mxu0 0.0
    %376 = vmatprep.subr.mxu0 0.0
    %377 = vmatpush1.msra.mxu0 0.0
    %378 = vmatprep.subr.mxu0 0.0
    %379 = vmatpush1.msra.mxu0 0.0
    %380 = vmatprep.subr.mxu0 0.0
    %381 = vmatpush1.msra.mxu0 0.0
    %382 = vmatprep.subr.mxu0 0.0
    %383 = vmatpush1.msra.mxu0 0.0
    %384 = vmatprep.subr.mxu0 0.0
    %385 = vmatpush1.msra.mxu0 0.0
    %386 = vmatprep.subr.mxu0 0.0
    %387 = vmatpush1.msra.mxu0 0.0
    %388 = vmatprep.subr.mxu0 0.0
    %389 = vmatpush1.msra.mxu0 0.0
    %390 = vmatprep.subr.mxu0 0.0
    %391 = vmatpush1.msra.mxu0 0.0
    %392 = vmatprep.subr.mxu0 0.0
    %393 = vmatpush1.msra.mxu0 0.0
    %394 = vmatprep.mubr.f32.mxu0 0.0
    %395 = vmatmul.mubr.f32.gmra.mrb[0].mxu0 %v328
    %v396 = vpop.f32.mrb[0].mxu0
    %v397 = vadd.f32 %v324, %v396
    %v398 = vpop.f32.mrb[0].mxu0
    %399 = vdwg.mxu0
    %v400 = vlaneseq
    %v401 = vshrl.u32 %v400, 7
    %v402 = vsub.s32 0, %v401
    %v403 = vrot.slane %v251, %v402
    %v404 = vadd.f32 %v397, %v403
    %v405 = vxor.u32 %v404, 2147483648
    %v406 = vmul.f32 %v405, 1.442695
    %v407 = vpow.pop %v406
    %v408 = vadd.f32 %v407, 1.0
    %v409 = vrcp.pop %v408
    %v410 = vmul.f32 1.0, %v409
    %v411 = vld [vmem:[#allocation5 + $0x78] sm:$0xff]
    %v412 = vld [vmem:[#allocation5 + $0x80] sm:$0xff]
    %v413 = vld [vmem:[#allocation5 + $0x88] sm:$0xff]
    %v414 = vld [vmem:[#allocation5 + $0x90] sm:$0xff]
    %v415 = vld [vmem:[#allocation5 + $0x98] sm:$0x1]
    %v416 = vlaneseq
    %v417 = vshrl.u32 %v416, 7
    %v418 = vsub.s32 0, %v417
    %v419 = vrot.slane %v415, %v418
    %v421 = vsel %vm103, %v410, 0
    %423 = vmatprep.subr.mxu0 0.0
    %424 = vmatpush1.msra.mxu0 %v411
    %425 = vmatprep.subr.mxu0 0.0
    %426 = vmatpush1.msra.mxu0 %v412
    %427 = vmatprep.subr.mxu0 0.0
    %428 = vmatpush1.msra.mxu0 %v413
    %429 = vmatprep.subr.mxu0 0.0
    %430 = vmatpush1.msra.mxu0 %v414
    %431 = vmatprep.subr.mxu0 0.0
    %432 = vmatpush1.msra.mxu0 0.0
    %433 = vmatprep.subr.mxu0 0.0
    %434 = vmatpush1.msra.mxu0 0.0
    %435 = vmatprep.subr.mxu0 0.0
    %436 = vmatpush1.msra.mxu0 0.0
    %437 = vmatprep.subr.mxu0 0.0
    %438 = vmatpush1.msra.mxu0 0.0
    %439 = vmatprep.subr.mxu0 0.0
    %440 = vmatpush1.msra.mxu0 0.0
    %441 = vmatprep.subr.mxu0 0.0
    %442 = vmatpush1.msra.mxu0 0.0
    %443 = vmatprep.subr.mxu0 0.0
    %444 = vmatpush1.msra.mxu0 0.0
    %445 = vmatprep.subr.mxu0 0.0
    %446 = vmatpush1.msra.mxu0 0.0
    %447 = vmatprep.subr.mxu0 0.0
    %448 = vmatpush1.msra.mxu0 0.0
    %449 = vmatprep.subr.mxu0 0.0
    %450 = vmatpush1.msra.mxu0 0.0
    %451 = vmatprep.subr.mxu0 0.0
    %452 = vmatpush1.msra.mxu0 0.0
    %453 = vmatprep.subr.mxu0 0.0
    %454 = vmatpush1.msra.mxu0 0.0
    %455 = vmatprep.subr.mxu0 0.0
    %456 = vmatpush1.msra.mxu0 0.0
    %457 = vmatprep.subr.mxu0 0.0
    %458 = vmatpush1.msra.mxu0 0.0
    %459 = vmatprep.subr.mxu0 0.0
    %460 = vmatpush1.msra.mxu0 0.0
    %461 = vmatprep.subr.mxu0 0.0
    %462 = vmatpush1.msra.mxu0 0.0
    %463 = vmatprep.subr.mxu0 0.0
    %464 = vmatpush1.msra.mxu0 0.0
    %465 = vmatprep.subr.mxu0 0.0
    %466 = vmatpush1.msra.mxu0 0.0
    %467 = vmatprep.subr.mxu0 0.0
    %468 = vmatpush1.msra.mxu0 0.0
    %469 = vmatprep.subr.mxu0 0.0
    %470 = vmatpush1.msra.mxu0 0.0
    %471 = vmatprep.subr.mxu0 0.0
    %472 = vmatpush1.msra.mxu0 0.0
    %473 = vmatprep.subr.mxu0 0.0
    %474 = vmatpush1.msra.mxu0 0.0
    %475 = vmatprep.subr.mxu0 0.0
    %476 = vmatpush1.msra.mxu0 0.0
    %477 = vmatprep.subr.mxu0 0.0
    %478 = vmatpush1.msra.mxu0 0.0
    %479 = vmatprep.subr.mxu0 0.0
    %480 = vmatpush1.msra.mxu0 0.0
    %481 = vmatprep.subr.mxu0 0.0
    %482 = vmatpush1.msra.mxu0 0.0
    %483 = vmatprep.subr.mxu0 0.0
    %484 = vmatpush1.msra.mxu0 0.0
    %485 = vmatprep.subr.mxu0 0.0
    %486 = vmatpush1.msra.mxu0 0.0
    %487 = vmatprep.mubr.f32.mxu0 0.0
    %488 = vmatmul.mubr.f32.gmra.mrb[0].mxu0 %v421
    %v489 = vpop.f32.mrb[0].mxu0
    %v490 = vadd.f32 %v419, %v489
    %v491 = vpop.f32.mrb[0].mxu0
    %492 = vdwg.mxu0
    %493 = vst [vmem:[#allocation7] sm:$0xff] %v490
    // Predicated region
    $region18: #{deepgo_forward.1} parent=1 // pred_check
      _
    $region19: #{deepgo_forward.1} parent=1 // pred_check_branch
      %495 = sbr.rel (0) target = $region21
    $region20: #{deepgo_forward.1} parent=1 // pred_region
      %s497 = ssub.s32 128, 128
      %498 = vsyncadd [#allocation4], %s497
      %s500 = sshll.u32 [#allocation7], 4
      %s501 = int_to_ptr.vmem [resolvable:$true] %s500
      %503 = dma.vmem_to_hbm [thread:$0]  %s501, 128, %s2, [#allocation4]
    $region21: #{deepgo_forward.1} parent=1 // pred_fallthru
      _
    // Predicated region
    $region22: #{deepgo_forward.1} parent=1 // pred_check
      _
    $region23: #{deepgo_forward.1} parent=1 // pred_check_branch
      %505 = sbr.rel (0) target = $region25
    $region24: #{deepgo_forward.1} parent=1 // pred_region
      %506 = dma.done [#allocation4], 128
    $region25: #{deepgo_forward.1} parent=1 // pred_fallthru
      _
    %507 = vsyncpa [#allocation3], 1
    %508 = vsyncpa [#allocation6], 1
    %509 = vsyncpa [#allocation4], 1

</llo_original>
